<compile_context>
chip_gen: v5e
topology: v5e:2x2
jax: 0.10.0
libtpu: 0.0.40
codegen_flags: <defaults>
</compile_context>

<pallas_src>
import math
from functools import partial

import numpy as np
import jax
import jax.numpy as jnp
from jax.experimental import pallas as pl
from jax.experimental.pallas import tpu as pltpu

# ---- module hyper-parameters (small, consistent with the torch module) ------
HIDDEN = 32
N_PROGRAM = 4
BATCH = 2
LENGTH = 8
PROGRAM_LENGTH = 5          # n_step
N_TYPE_TEMPLATE = 3
N_TYPE = 6
MASK_OUT_TEMPLATES = (2,)   # same role as self.mask_out_templates
FINAL_SIZE = HIDDEN + N_TYPE_TEMPLATE + 2


# -----------------------------------------------------------------------------
# Compile-time constants derived from the module's fixed program_key /
# program_query / program_templates (pure Python / numpy, never traced
# inside the kernel body).
# -----------------------------------------------------------------------------
def _ops_table(S, NT):
    """ops_table[i][t] = op index selected by the one-hot template at step i,
    template t.  Op order: 0=select, 1=and, 2=or, 3=not, 4=copy, 5=deduce."""
    tmpl = [[4] * S for _ in range(NT)]
    for t in range(NT):
        tmpl[t][0] = 0
    for t in range(1, NT):
        tmpl[t][1] = 0
        tmpl[t][2] = 1
    tmpl[2][3] = 0
    tmpl[2][4] = 1
    return [tuple(tmpl[t][i] for t in range(NT)) for i in range(S)]


def _arg1_weight_consts(S, NT, sigma):
    """a1[i][j] = tuple of NT softmax weights (python floats) applied to
    attention_logits[j] when forming arg1_logits at step i (j < i)."""
    def q(i, t, d):   # program_template_query[i, 0, t, d]
        if i == 2 and t >= 1 and d == 0:
            return 1000.0
        if i == 4 and t == 2 and d == 2:
            return 1000.0
        return 0.0

    consts = []
    for i in range(S):
        rows = []
        if i > 0:
            # key_j . query_{i,t} = query[i, t, j]  (key rows are unit vectors)
            logits = [[q(i, t, j) / sigma for t in range(NT)] for j in range(i)]
            for t in range(NT):
                col = [logits[j][t] for j in range(i)]
                m = max(col)
                e = [math.exp(v - m) for v in col]
                s = sum(e)
                for j in range(i):
                    logits[j][t] = e[j] / s
            rows = [tuple(logits[j]) for j in range(i)]
        consts.append(rows)
    return consts


def _pack_consts(S, NT, sigma, ops_table):
    """Pack arg1 weights and op one-hot selectors into one (S*(S+6), NT) table.

    For step i (row block of size S+6):
      rows [0, S)        : arg1 softmax weights w[i, j, :]  (zero for j >= i)
      rows [S, S+6)      : op-selection rows; row S+op holds, per template t,
                           1.0 iff ops_table[i][t] == op.
    """
    a1 = _arg1_weight_consts(S, NT, sigma)
    stride = S + 6
    c = np.zeros((S * stride, NT), np.float32)
    for i in range(S):
        for j in range(i):
            c[i * stride + j, :] = np.asarray(a1[i][j], np.float32)
        for t in range(NT):
            c[i * stride + S + ops_table[i][t], t] = 1.0
    return c


# -----------------------------------------------------------------------------
# Pallas kernel: fused select matmul + execute_program recurrence + scores
# -----------------------------------------------------------------------------
def _executor_kernel(B, L, S, P, NT, ops_table,
                     x_ref, vec_ref, aux_ref, consts_ref, out_ref):
    x = x_ref[...]                                # (B*L, H)
    vec = vec_ref[...]                            # (S*P, H)  projected program vecs
    H = x.shape[1]
    inv_sigma = 1.0 / (math.sqrt(H) * 6.0)

    # One MXU push for all S steps: (B*L, H) x (S*P, H)^T -> (B*L, S*P)
    sel_all = jax.lax.dot_general(
        x, vec, (((1,), (1,)), ((), ())),
        preferred_element_type=jnp.float32) * inv_sigma

    # Single lane-dense store of the reason attentions.
    out_ref[0:B * L, :] = sel_all

    # One max-over-L reduction for all steps (16,20) -> (2,8,20) -> (2,20).
    sel_max = jnp.max(sel_all.reshape(B, L, S * P), axis=1)

    consts = consts_ref[...]                      # (S*(S+6), NT)
    stride = S + 6

    def wvec(i, j):     # arg1 softmax weights for step i, prev step j -> (1,1,NT)
        return consts[i * stride + j][None, None, :]

    def opvec(i, op):   # template one-hot row for (step i, op) -> (1,1,NT)
        return consts[i * stride + S + op][None, None, :]

    att = []
    final = None
    for i in range(S):                            # execute_program loop (unrolled)
        sel_i = sel_max[:, i * P:(i + 1) * P][:, :, None]        # (B, P, 1)
        ops_i = ops_table[i]
        arg2 = att[i - 1] if i > 0 else None

        need_arg1 = any(op in (1, 2, 5) for op in ops_i)
        need_arg2 = any(op in (1, 2, 3, 4, 5) for op in ops_i)

        arg1 = None
        if need_arg1:
            if i == 0:
                arg1 = jnp.zeros((B, P, NT), jnp.float32)
            else:
                for j in range(i):
                    contrib = wvec(i, j) * att[j]
                    arg1 = contrib if arg1 is None else arg1 + contrib
        if need_arg2 and arg2 is None:
            arg2 = jnp.zeros((B, P, NT), jnp.float32)

        def term(op):
            if op == 0:
                return sel_i                                     # broadcasts to NT
            if op == 1:
                return jnp.minimum(arg1, arg2)
            if op == 2:
                return jnp.maximum(arg1, arg2)
            if op == 3:
                return -arg2
            if op == 4:
                return arg2
            return jnp.maximum(-arg1, arg2)                      # deduce

        # final = sum over selected ops of template-one-hot * op_logits
        final = None
        for op in sorted(set(ops_i)):
            contrib = opvec(i, op) * term(op)                    # (B, P, NT)
            final = contrib if final is None else final + contrib
        att.append(final)

    # scores = ((final * scale0 + bias0) * type_index).sum(-1)
    aux = aux_ref[...]                            # (P, NT+2): [type_index | bias | scale]
    type_index = aux[:, 0:NT]                     # (P, NT)
    bias0 = aux[:, NT:NT + 1]                     # (P, 1)
    scale0 = aux[:, NT + 1:NT + 2]                # (P, 1)
    out_scores = final * scale0[None] + bias0[None]              # (B, P, NT)
    scores = jnp.sum(out_scores * type_index[None], axis=-1)     # (B, P)
    out_ref[B * L:B * L + B, 0:P] = scores


# -----------------------------------------------------------------------------
# Wrapper: forward()
# -----------------------------------------------------------------------------
@jax.jit
def program_executor_forward(inputs, program, params):
    weight, bias = params["weight"], params["bias"]    # torch Linear: (F, H), (F,)
    B, L, H = inputs.shape
    S, P, _ = program.shape
    F = weight.shape[0]
    NT = N_TYPE_TEMPLATE
    sigma = math.sqrt(H) * 6.0

    # program = self.program_final_layer(program) — computed ONCE, shared between
    # the kernel inputs and the aux outputs.
    proj = jnp.einsum("sph,fh->spf", program, weight) + bias     # (S, P, F)
    program_vec = proj[:, :, None, :H]
    type_logits = proj[0, :, H:F - 2]
    if len(MASK_OUT_TEMPLATES) != 0:
        type_logits = type_logits.at[:, jnp.array(MASK_OUT_TEMPLATES)].set(-100.0)
    program_type_index = jax.nn.softmax(type_logits, axis=1)     # (P, NT)
    program_bias = proj[:, :, None, -2]
    program_scale = proj[:, :, None, -1]

    # kernel inputs (all lane-dense, full-block VMEM)
    x2 = inputs.reshape(B * L, H)                                # (B*L, H)
    vec_all = proj[:, :, :H].reshape(S * P, H)                   # (S*P, H)
    aux = jnp.concatenate(
        [program_type_index, proj[0, :, -2:-1], proj[0, :, -1:]], axis=1)  # (P, NT+2)

    ops_table = _ops_table(S, NT)
    consts = jnp.asarray(_pack_consts(S, NT, sigma, ops_table))  # (S*(S+6), NT)

    kernel = partial(_executor_kernel, B, L, S, P, NT, ops_table)
    packed = pl.pallas_call(
        kernel,
        out_shape=jax.ShapeDtypeStruct((B * L + B, S * P), jnp.float32),
        in_specs=[pl.BlockSpec(memory_space=pltpu.MemorySpace.VMEM)] * 4,
        out_specs=pl.BlockSpec(memory_space=pltpu.MemorySpace.VMEM),
    )(x2, vec_all, aux, consts)

    reason_attentions = packed[:B * L, :].reshape(B, L, S, P).transpose(2, 0, 1, 3)
    scores = packed[B * L:B * L + B, :P]
    return scores, reason_attentions, (program_vec, program_bias,
                                       program_scale, program_type_index)


# -----------------------------------------------------------------------------
# Pure-JAX reference (direct port of the torch forward) for validation
# -----------------------------------------------------------------------------
def _build_constants(dtype=jnp.float32):
    tmpl = jnp.full((N_TYPE_TEMPLATE, PROGRAM_LENGTH), 4, dtype=jnp.int32)
    tmpl = tmpl.at[:, 0].set(0)
    tmpl = tmpl.at[1:, 1].set(0)
    tmpl = tmpl.at[1:, 2].set(1)
    tmpl = tmpl.at[2, 3].set(0)
    tmpl = tmpl.at[2, 4].set(1)
    tmpl_onehot = jax.nn.one_hot(tmpl, N_TYPE, dtype=dtype)        # (3, 5, 6)
    types = jnp.transpose(tmpl_onehot, (1, 0, 2))                  # (5, 3, 6)

    program_key = jnp.zeros((PROGRAM_LENGTH, 1, 1, HIDDEN), dtype)
    program_key = program_key.at[:, 0, 0, :PROGRAM_LENGTH].set(
        jnp.eye(PROGRAM_LENGTH, dtype=dtype))
    program_query = jnp.zeros((PROGRAM_LENGTH, 1, N_TYPE_TEMPLATE, HIDDEN), dtype)
    program_query = program_query.at[2, :, 1:, 0].set(1000.0)
    program_query = program_query.at[4, :, 2, 2].set(1000.0)
    return types, program_key, program_query


def reference_forward(inputs, program, params):
    weight, bias = params["weight"], params["bias"]
    B, L, H = inputs.shape
    S, P, _ = program.shape
    F = weight.shape[0]
    NT = N_TYPE_TEMPLATE
    sigma = math.sqrt(H) * 6.0

    proj = jnp.einsum("sph,fh->spf", program, weight) + bias
    program_vec = proj[:, :, None, :H]
    type_logits = proj[0, :, H:F - 2]
    if len(MASK_OUT_TEMPLATES) != 0:
        type_logits = type_logits.at[:, jnp.array(MASK_OUT_TEMPLATES)].set(-100.0)
    program_type_index = jax.nn.softmax(type_logits, axis=1)
    program_bias = proj[:, :, None, -2]
    program_scale = proj[:, :, None, -1]

    types, program_key, program_query = _build_constants()
    program_templates = types[:, None]             # (S, 1, NT, 6)

    att_list, select_all = [], []
    final_logits = None
    for i in range(S):
        _vec = program_vec[i]                      # (P, 1, H)
        _query = program_query[i]                  # (1, NT, H)
        _type = program_templates[i]               # (1, NT, 6)
        sel_sent = jnp.matmul(inputs, _vec[:, 0].T) / sigma       # (B, L, P)
        select_all.append(sel_sent)
        sel = jnp.max(sel_sent, axis=1)[..., None]                # (B, P, 1)
        if i == 0:
            arg1_logits = jnp.zeros((B, P, NT), jnp.float32)
            arg2_logits = arg1_logits
        else:
            arg1 = jax.nn.softmax(
                (program_key[:i] * _query[None]).sum(-1) / sigma, axis=0)  # (i,1,NT)
            att_stack = jnp.stack(att_list)                        # (i, B, P, NT)
            arg1_logits = (arg1[:, None] * att_stack).sum(0)
            arg2_logits = att_list[-1]
        and_l = jnp.minimum(arg1_logits, arg2_logits)
        or_l = jnp.maximum(arg1_logits, arg2_logits)
        not_l = -arg2_logits
        copy_l = arg2_logits
        ded_l = jnp.maximum(-arg1_logits, arg2_logits)
        sel_b = jnp.broadcast_to(sel, and_l.shape)
        stacked = jnp.stack([sel_b, and_l, or_l, not_l, copy_l, ded_l], axis=3)
        final_logits = (_type[None] * stacked).sum(3)
        att_list.append(final_logits)

    out_scores = final_logits * program_scale[0] + program_bias[0]
    scores = (out_scores * program_type_index).sum(-1)
    return scores, jnp.stack(select_all)


if __name__ == "__main__":
    key = jax.random.PRNGKey(0)
    k1, k2, k3, k4 = jax.random.split(key, 4)
    inputs = jax.random.normal(k1, (BATCH, LENGTH, HIDDEN), jnp.float32)
    program = jax.random.normal(k2, (PROGRAM_LENGTH, N_PROGRAM, HIDDEN), jnp.float32)

    # deterministic Linear(hidden, hidden + 3 + 2) parameters (torch-style init)
    bound = 1.0 / math.sqrt(HIDDEN)
    params = {
        "weight": jax.random.uniform(k3, (FINAL_SIZE, HIDDEN), jnp.float32, -bound, bound),
        "bias": jax.random.uniform(k4, (FINAL_SIZE,), jnp.float32, -bound, bound),
    }

    scores, reason_attn, aux = program_executor_forward(inputs, program, params)
    scores = jax.block_until_ready(scores)
    reason_attn = jax.block_until_ready(reason_attn)

    ref_scores, ref_attn = reference_forward(inputs, program, params)
    assert scores.shape == (BATCH, N_PROGRAM)
    assert reason_attn.shape == (PROGRAM_LENGTH, BATCH, LENGTH, N_PROGRAM)
    assert jnp.allclose(scores, ref_scores, atol=1e-3, rtol=1e-3)
    assert jnp.allclose(reason_attn, ref_attn, atol=1e-3, rtol=1e-3)
    print("KERNEL_OK")
</pallas_src>

<mosaic_0001>
module attributes {stable_mosaic.version = 11 : i64} {
  func.func @_executor_kernel(%arg0: memref<16x32xf32, #tpu.memory_space<vmem>>, %arg1: memref<20x32xf32, #tpu.memory_space<vmem>>, %arg2: memref<4x5xf32, #tpu.memory_space<vmem>>, %arg3: memref<55x3xf32, #tpu.memory_space<vmem>>, %arg4: memref<18x20xf32, #tpu.memory_space<vmem>>) attributes {dimension_semantics = [], scalar_prefetch = 0 : i64, scratch_operands = 0 : i64, tpu.core_type = #tpu.core_type<tc>} {
    %c0 = arith.constant 0 : index
    %c0_0 = arith.constant 0 : index
    %0 = vector.load %arg0[%c0, %c0_0] : memref<16x32xf32, #tpu.memory_space<vmem>>, vector<16x32xf32>
    %c0_1 = arith.constant 0 : index
    %c0_2 = arith.constant 0 : index
    %1 = vector.load %arg1[%c0_1, %c0_2] : memref<20x32xf32, #tpu.memory_space<vmem>>, vector<20x32xf32>
    %cst = arith.constant dense<0.000000e+00> : vector<16x20xf32>
    %2 = tpu.matmul %0, %1, %cst {dimension_numbers = #tpu.dot_dimension_numbers<[1], [1], [0], [0], [0, 0, 1, 0], [], []>} : vector<16x32xf32>, vector<20x32xf32>, vector<16x20xf32> -> vector<16x20xf32>
    %cst_3 = arith.constant 0.0294627827 : f32
    %3 = vector.broadcast %cst_3 : f32 to vector<16x20xf32>
    %4 = arith.mulf %2, %3 : vector<16x20xf32>
    %c0_4 = arith.constant 0 : index
    %c0_5 = arith.constant 0 : index
    %5 = vector.load %arg4[%c0_4, %c0_5] : memref<18x20xf32, #tpu.memory_space<vmem>>, vector<16x20xf32>
    tpu.vector_store %arg4[%c0_4, %c0_5], %4 {strides = array<i32>} : memref<18x20xf32, #tpu.memory_space<vmem>>, vector<16x20xf32>,
    %6 = vector.shape_cast %4 : vector<16x20xf32> to vector<2x8x20xf32>
    %cst_6 = arith.constant dense<0xFF800000> : vector<2x20xf32>
    %7 = vector.multi_reduction <maximumf>, %6, %cst_6 [1] : vector<2x8x20xf32> to vector<2x20xf32>
    %c0_7 = arith.constant 0 : index
    %c0_8 = arith.constant 0 : index
    %8 = vector.load %arg3[%c0_7, %c0_8] : memref<55x3xf32, #tpu.memory_space<vmem>>, vector<55x3xf32>
    %9 = vector.extract_strided_slice %7 {offsets = [0, 0], sizes = [2, 4], strides = [1, 1]} : vector<2x20xf32> to vector<2x4xf32>
    %10 = vector.shape_cast %9 : vector<2x4xf32> to vector<2x4x1xf32>
    %11 = vector.extract_strided_slice %8 {offsets = [5, 0], sizes = [1, 3], strides = [1, 1]} : vector<55x3xf32> to vector<1x3xf32>
    %12 = vector.shape_cast %11 : vector<1x3xf32> to vector<3xf32>
    %13 = vector.shape_cast %12 : vector<3xf32> to vector<1x1x3xf32>
    %14 = vector.broadcast %13 : vector<1x1x3xf32> to vector<2x4x3xf32>
    %15 = vector.broadcast %10 : vector<2x4x1xf32> to vector<2x4x3xf32>
    %16 = arith.mulf %14, %15 : vector<2x4x3xf32>
    %17 = vector.extract_strided_slice %7 {offsets = [0, 4], sizes = [2, 4], strides = [1, 1]} : vector<2x20xf32> to vector<2x4xf32>
    %18 = vector.shape_cast %17 : vector<2x4xf32> to vector<2x4x1xf32>
    %19 = vector.extract_strided_slice %8 {offsets = [16, 0], sizes = [1, 3], strides = [1, 1]} : vector<55x3xf32> to vector<1x3xf32>
    %20 = vector.shape_cast %19 : vector<1x3xf32> to vector<3xf32>
    %21 = vector.shape_cast %20 : vector<3xf32> to vector<1x1x3xf32>
    %22 = vector.broadcast %21 : vector<1x1x3xf32> to vector<2x4x3xf32>
    %23 = vector.broadcast %18 : vector<2x4x1xf32> to vector<2x4x3xf32>
    %24 = arith.mulf %22, %23 : vector<2x4x3xf32>
    %25 = vector.extract_strided_slice %8 {offsets = [20, 0], sizes = [1, 3], strides = [1, 1]} : vector<55x3xf32> to vector<1x3xf32>
    %26 = vector.shape_cast %25 : vector<1x3xf32> to vector<3xf32>
    %27 = vector.shape_cast %26 : vector<3xf32> to vector<1x1x3xf32>
    %28 = vector.broadcast %27 : vector<1x1x3xf32> to vector<2x4x3xf32>
    %29 = arith.mulf %28, %16 : vector<2x4x3xf32>
    %30 = arith.addf %24, %29 : vector<2x4x3xf32>
    %31 = vector.extract_strided_slice %8 {offsets = [22, 0], sizes = [1, 3], strides = [1, 1]} : vector<55x3xf32> to vector<1x3xf32>
    %32 = vector.shape_cast %31 : vector<1x3xf32> to vector<3xf32>
    %33 = vector.shape_cast %32 : vector<3xf32> to vector<1x1x3xf32>
    %34 = vector.broadcast %33 : vector<1x1x3xf32> to vector<2x4x3xf32>
    %35 = arith.mulf %34, %16 : vector<2x4x3xf32>
    %36 = vector.extract_strided_slice %8 {offsets = [23, 0], sizes = [1, 3], strides = [1, 1]} : vector<55x3xf32> to vector<1x3xf32>
    %37 = vector.shape_cast %36 : vector<1x3xf32> to vector<3xf32>
    %38 = vector.shape_cast %37 : vector<3xf32> to vector<1x1x3xf32>
    %39 = vector.broadcast %38 : vector<1x1x3xf32> to vector<2x4x3xf32>
    %40 = arith.mulf %39, %30 : vector<2x4x3xf32>
    %41 = arith.addf %35, %40 : vector<2x4x3xf32>
    %42 = vector.extract_strided_slice %8 {offsets = [28, 0], sizes = [1, 3], strides = [1, 1]} : vector<55x3xf32> to vector<1x3xf32>
    %43 = vector.shape_cast %42 : vector<1x3xf32> to vector<3xf32>
    %44 = vector.shape_cast %43 : vector<3xf32> to vector<1x1x3xf32>
    %45 = arith.minimumf %41, %30 : vector<2x4x3xf32>
    %46 = vector.broadcast %44 : vector<1x1x3xf32> to vector<2x4x3xf32>
    %47 = arith.mulf %46, %45 : vector<2x4x3xf32>
    %48 = vector.extract_strided_slice %8 {offsets = [31, 0], sizes = [1, 3], strides = [1, 1]} : vector<55x3xf32> to vector<1x3xf32>
    %49 = vector.shape_cast %48 : vector<1x3xf32> to vector<3xf32>
    %50 = vector.shape_cast %49 : vector<3xf32> to vector<1x1x3xf32>
    %51 = vector.broadcast %50 : vector<1x1x3xf32> to vector<2x4x3xf32>
    %52 = arith.mulf %51, %30 : vector<2x4x3xf32>
    %53 = arith.addf %47, %52 : vector<2x4x3xf32>
    %54 = vector.extract_strided_slice %7 {offsets = [0, 12], sizes = [2, 4], strides = [1, 1]} : vector<2x20xf32> to vector<2x4xf32>
    %55 = vector.shape_cast %54 : vector<2x4xf32> to vector<2x4x1xf32>
    %56 = vector.extract_strided_slice %8 {offsets = [38, 0], sizes = [1, 3], strides = [1, 1]} : vector<55x3xf32> to vector<1x3xf32>
    %57 = vector.shape_cast %56 : vector<1x3xf32> to vector<3xf32>
    %58 = vector.shape_cast %57 : vector<3xf32> to vector<1x1x3xf32>
    %59 = vector.broadcast %58 : vector<1x1x3xf32> to vector<2x4x3xf32>
    %60 = vector.broadcast %55 : vector<2x4x1xf32> to vector<2x4x3xf32>
    %61 = arith.mulf %59, %60 : vector<2x4x3xf32>
    %62 = vector.extract_strided_slice %8 {offsets = [42, 0], sizes = [1, 3], strides = [1, 1]} : vector<55x3xf32> to vector<1x3xf32>
    %63 = vector.shape_cast %62 : vector<1x3xf32> to vector<3xf32>
    %64 = vector.shape_cast %63 : vector<3xf32> to vector<1x1x3xf32>
    %65 = vector.broadcast %64 : vector<1x1x3xf32> to vector<2x4x3xf32>
    %66 = arith.mulf %65, %53 : vector<2x4x3xf32>
    %67 = arith.addf %61, %66 : vector<2x4x3xf32>
    %68 = vector.extract_strided_slice %8 {offsets = [44, 0], sizes = [1, 3], strides = [1, 1]} : vector<55x3xf32> to vector<1x3xf32>
    %69 = vector.shape_cast %68 : vector<1x3xf32> to vector<3xf32>
    %70 = vector.shape_cast %69 : vector<3xf32> to vector<1x1x3xf32>
    %71 = vector.broadcast %70 : vector<1x1x3xf32> to vector<2x4x3xf32>
    %72 = arith.mulf %71, %16 : vector<2x4x3xf32>
    %73 = vector.extract_strided_slice %8 {offsets = [45, 0], sizes = [1, 3], strides = [1, 1]} : vector<55x3xf32> to vector<1x3xf32>
    %74 = vector.shape_cast %73 : vector<1x3xf32> to vector<3xf32>
    %75 = vector.shape_cast %74 : vector<3xf32> to vector<1x1x3xf32>
    %76 = vector.broadcast %75 : vector<1x1x3xf32> to vector<2x4x3xf32>
    %77 = arith.mulf %76, %30 : vector<2x4x3xf32>
    %78 = arith.addf %72, %77 : vector<2x4x3xf32>
    %79 = vector.extract_strided_slice %8 {offsets = [46, 0], sizes = [1, 3], strides = [1, 1]} : vector<55x3xf32> to vector<1x3xf32>
    %80 = vector.shape_cast %79 : vector<1x3xf32> to vector<3xf32>
    %81 = vector.shape_cast %80 : vector<3xf32> to vector<1x1x3xf32>
    %82 = vector.broadcast %81 : vector<1x1x3xf32> to vector<2x4x3xf32>
    %83 = arith.mulf %82, %53 : vector<2x4x3xf32>
    %84 = arith.addf %78, %83 : vector<2x4x3xf32>
    %85 = vector.extract_strided_slice %8 {offsets = [47, 0], sizes = [1, 3], strides = [1, 1]} : vector<55x3xf32> to vector<1x3xf32>
    %86 = vector.shape_cast %85 : vector<1x3xf32> to vector<3xf32>
    %87 = vector.shape_cast %86 : vector<3xf32> to vector<1x1x3xf32>
    %88 = vector.broadcast %87 : vector<1x1x3xf32> to vector<2x4x3xf32>
    %89 = arith.mulf %88, %67 : vector<2x4x3xf32>
    %90 = arith.addf %84, %89 : vector<2x4x3xf32>
    %91 = vector.extract_strided_slice %8 {offsets = [50, 0], sizes = [1, 3], strides = [1, 1]} : vector<55x3xf32> to vector<1x3xf32>
    %92 = vector.shape_cast %91 : vector<1x3xf32> to vector<3xf32>
    %93 = vector.shape_cast %92 : vector<3xf32> to vector<1x1x3xf32>
    %94 = arith.minimumf %90, %67 : vector<2x4x3xf32>
    %95 = vector.broadcast %93 : vector<1x1x3xf32> to vector<2x4x3xf32>
    %96 = arith.mulf %95, %94 : vector<2x4x3xf32>
    %97 = vector.extract_strided_slice %8 {offsets = [53, 0], sizes = [1, 3], strides = [1, 1]} : vector<55x3xf32> to vector<1x3xf32>
    %98 = vector.shape_cast %97 : vector<1x3xf32> to vector<3xf32>
    %99 = vector.shape_cast %98 : vector<3xf32> to vector<1x1x3xf32>
    %100 = vector.broadcast %99 : vector<1x1x3xf32> to vector<2x4x3xf32>
    %101 = arith.mulf %100, %67 : vector<2x4x3xf32>
    %102 = arith.addf %96, %101 : vector<2x4x3xf32>
    %c0_9 = arith.constant 0 : index
    %c0_10 = arith.constant 0 : index
    %103 = vector.load %arg2[%c0_9, %c0_10] : memref<4x5xf32, #tpu.memory_space<vmem>>, vector<4x5xf32>
    %104 = vector.extract_strided_slice %103 {offsets = [0, 0], sizes = [4, 3], strides = [1, 1]} : vector<4x5xf32> to vector<4x3xf32>
    %105 = vector.extract_strided_slice %103 {offsets = [0, 3], sizes = [4, 1], strides = [1, 1]} : vector<4x5xf32> to vector<4x1xf32>
    %106 = vector.extract_strided_slice %103 {offsets = [0, 4], sizes = [4, 1], strides = [1, 1]} : vector<4x5xf32> to vector<4x1xf32>
    %107 = vector.shape_cast %106 : vector<4x1xf32> to vector<1x4x1xf32>
    %108 = vector.broadcast %107 : vector<1x4x1xf32> to vector<2x4x3xf32>
    %109 = arith.mulf %102, %108 : vector<2x4x3xf32>
    %110 = vector.shape_cast %105 : vector<4x1xf32> to vector<1x4x1xf32>
    %111 = vector.broadcast %110 : vector<1x4x1xf32> to vector<2x4x3xf32>
    %112 = arith.addf %109, %111 : vector<2x4x3xf32>
    %113 = vector.shape_cast %104 : vector<4x3xf32> to vector<1x4x3xf32>
    %114 = vector.broadcast %113 : vector<1x4x3xf32> to vector<2x4x3xf32>
    %115 = arith.mulf %112, %114 : vector<2x4x3xf32>
    %cst_11 = arith.constant dense<0.000000e+00> : vector<2x4xf32>
    %116 = vector.multi_reduction <add>, %115, %cst_11 [2] : vector<2x4x3xf32> to vector<2x4xf32>
    %c16 = arith.constant 16 : index
    %c0_12 = arith.constant 0 : index
    %117 = vector.load %arg4[%c16, %c0_12] : memref<18x20xf32, #tpu.memory_space<vmem>>, vector<2x4xf32>
    tpu.vector_store %arg4[%c16, %c0_12], %116 {strides = array<i32>} : memref<18x20xf32, #tpu.memory_space<vmem>>, vector<2x4xf32>,
    return
  }
}

</mosaic_0001>

<llo_original>
// kernel: program_executor_forward.1
$region0: #{program_executor_forward.1}
  #allocation0 [shape = 'u32[]', space=smem, size = 0x4, offset = 0x4, fixed_abs, tag = 'smem constant byte address 0x4 - core index']
  #allocation1 [shape = 'u32[72,128]{1,0:T(1,128)}', space=vmem, size = 0x9000, scoped, tag = 'internal scratch']
  %s0 = inlined_call_operand.vmem [shape: f32[16,32], index: 0, kind: input, shape index: {}]
  %s1 = inlined_call_operand.vmem [shape: f32[20,32], index: 1, kind: input, shape index: {}]
  %s2 = inlined_call_operand.vmem [shape: f32[4,5], index: 2, kind: input, shape index: {}]
  %s3 = inlined_call_operand.vmem [shape: f32[55,3], index: 3, kind: input, shape index: {}]
  %s4 = inlined_call_operand.vmem [shape: f32[18,20], index: 4, kind: output, shape index: {}]
  %s5 = sld [smem:[#allocation0]]
  $region26: #{program_executor_forward.1} parent=0
    _
  %s7 = ssub.s32 1, %s5
  %s8 = scalar_select 0, %s7, %s5
  // Predicated region
  $region2: #{program_executor_forward.1} parent=0 // pred_check
    _
  $region3: #{program_executor_forward.1} parent=0 // pred_check_branch
    %10 = sbr.rel (0) target = $region5
  $region4: #{program_executor_forward.1} parent=0 // pred_region
    _
  $region5: #{program_executor_forward.1} parent=0 // pred_fallthru
    _
  // Predicated region
  $region6: #{program_executor_forward.1} parent=0 // pred_check
    _
  $region7: #{program_executor_forward.1} parent=0 // pred_check_branch
    %12 = sbr.rel (0) target = $region9
  $region8: #{program_executor_forward.1} parent=0 // pred_region
    _
  $region9: #{program_executor_forward.1} parent=0 // pred_fallthru
    _
  // Predicated region
  $region10: #{program_executor_forward.1} parent=0 // pred_check
    _
  $region11: #{program_executor_forward.1} parent=0 // pred_check_branch
    %14 = sbr.rel (0) target = $region13
  $region12: #{program_executor_forward.1} parent=0 // pred_region
    _
  $region13: #{program_executor_forward.1} parent=0 // pred_fallthru
    _
  // Predicated region
  $region14: #{program_executor_forward.1} parent=0 // pred_check
    _
  $region15: #{program_executor_forward.1} parent=0 // pred_check_branch
    %16 = sbr.rel (0) target = $region17
  $region16: #{program_executor_forward.1} parent=0 // pred_region
    _
  $region17: #{program_executor_forward.1} parent=0 // pred_fallthru
    _
  %v17 = vld [vmem:[%s0] sm:$0xff]
  %v18 = vld [vmem:[%s0 + $0x8] sm:$0xff]
  %v19 = vld [vmem:[%s1] sm:$0xff]
  %v20 = vld [vmem:[%s1 + $0x8] sm:$0xff]
  %v21 = vld [vmem:[%s1 + $0x10] sm:$0xf]
  %vm22 = vcmask 261120
  %v24 = vsel %vm22, %v17, 0
  %v27 = vsel %vm22, %v18, 0
  %v30 = vsel %vm22, %v19, 0
  %v33 = vsel %vm22, %v20, 0
  %v36 = vsel %vm22, %v21, 0
  %38 = vmatpush.xpose.msra.mxu0 0.0
  %39 = vmatpush.xpose.msra.mxu0 0.0
  %40 = vmatpush.xpose.msra.mxu0 0.0
  %41 = vmatpush.xpose.msra.mxu0 0.0
  %42 = vmatpush.xpose.msra.mxu0 0.0
  %43 = vmatpush.xpose.msra.mxu0 0.0
  %44 = vmatpush.xpose.msra.mxu0 0.0
  %45 = vmatpush.xpose.msra.mxu0 0.0
  %46 = vmatpush.xpose.msra.mxu0 0.0
  %47 = vmatpush.xpose.msra.mxu0 0.0
  %48 = vmatpush.xpose.msra.mxu0 0.0
  %49 = vmatpush.xpose.msra.mxu0 0.0
  %50 = vmatpush.xpose.msra.mxu0 0.0
  %51 = vmatpush.xpose.msra.mxu0 %v36
  %52 = vmatpush.xpose.msra.mxu0 %v33
  %53 = vmatpush.xpose.msra.mxu0 %v30
  %54 = vmatmul.f32.gmra.mxu0 %v24
  %v55 = vpop.f32.mrf.mxu0
  %v56 = vadd.f32 0.0, %v55
  %57 = vmatmul.f32.gmra.mxu0 %v27
  %v58 = vpop.f32.mrf.mxu0
  %v59 = vadd.f32 0.0, %v58
  %60 = vdwg.mxu0
  %v61 = vmul.f32 %v56, 0.029462783
  %v62 = vmul.f32 %v59, 0.029462783
  %vm63 = vcmask 162816
  %64 = vst.msk [vmem:[%s4] sm:$0xff] %vm63, %v61
  %65 = vst.msk [vmem:[%s4 + $0x8] sm:$0xff] %vm63, %v62
  %v66 = vsel %vm63, %v61, -inf
  %v67 = vrot.slane %v66, 4
  %v68 = vmax.f32 %v66, %v67
  %v69 = vrot.slane %v68, 2
  %v70 = vmax.f32 %v68, %v69
  %v71 = vrot.slane %v70, 1
  %v72 = vmax.f32 %v70, %v71
  %v73 = vsel %vm63, %v62, -inf
  %v74 = vrot.slane %v73, 4
  %v75 = vmax.f32 %v73, %v74
  %v76 = vrot.slane %v75, 2
  %v77 = vmax.f32 %v75, %v76
  %v78 = vrot.slane %v77, 1
  %v79 = vmax.f32 %v77, %v78
  %v80 = vld [vmem:[%s3] sm:$0xff]
  %v81 = vld [vmem:[%s3 + $0x10] sm:$0xff]
  %v82 = vld [vmem:[%s3 + $0x18] sm:$0xff]
  %v83 = vld [vmem:[%s3 + $0x20] sm:$0xff]
  %v84 = vld [vmem:[%s3 + $0x28] sm:$0xff]
  %v85 = vld [vmem:[%s3 + $0x30] sm:$0x7f]
  %v86 = vlaneseq
  %v87 = vshrl.u32 %v86, 7
  %89 = vset.pattern.permute.xlu0 %v87
  %90 = vperm.xlu0 %89, %v72
  %v91 = vpop.permute.xlu0 %90
  %v92 = vlaneseq
  %v93 = vshrl.u32 %v92, 7
  %95 = vset.pattern.permute.xlu0 %v93
  %96 = vperm.xlu0 %95, %v79
  %v97 = vpop.permute.xlu0 %96
  %v98 = vperm.slane %v80, 5
  %v99 = vmul.f32 %v98, %v91
  %v100 = vmul.f32 %v98, %v97
  %v101 = vlaneseq
  %v102 = vshrl.u32 %v101, 7
  %v103 = vadd.s32 %v102, 4
  %104 = vset.pattern.permute.xlu0 %v103
  %105 = vperm.xlu0 %104, %v72
  %v106 = vpop.permute.xlu0 %105
  %v107 = vlaneseq
  %v108 = vshrl.u32 %v107, 7
  %v109 = vadd.s32 %v108, 4
  %110 = vset.pattern.permute.xlu0 %v109
  %111 = vperm.xlu0 %110, %v79
  %v112 = vpop.permute.xlu0 %111
  %v113 = vperm.slane %v81, 0
  %v114 = vmul.f32 %v113, %v106
  %v115 = vmul.f32 %v113, %v112
  %v116 = vperm.slane %v81, 4
  %v117 = vmul.f32 %v116, %v99
  %v118 = vmul.f32 %v116, %v100
  %v119 = vadd.f32 %v114, %v117
  %v120 = vadd.f32 %v115, %v118
  %v121 = vperm.slane %v81, 6
  %v122 = vmul.f32 %v121, %v99
  %v123 = vmul.f32 %v121, %v100
  %v124 = vperm.slane %v81, 7
  %v125 = vmul.f32 %v124, %v119
  %v126 = vmul.f32 %v124, %v120
  %v127 = vadd.f32 %v122, %v125
  %v128 = vadd.f32 %v123, %v126
  %v129 = vmin.f32 %v127, %v119
  %v130 = vmin.f32 %v128, %v120
  %v131 = vperm.slane %v82, 4
  %v132 = vmul.f32 %v131, %v129
  %v133 = vmul.f32 %v131, %v130
  %v134 = vperm.slane %v82, 7
  %v135 = vmul.f32 %v134, %v119
  %v136 = vmul.f32 %v134, %v120
  %v137 = vadd.f32 %v132, %v135
  %v138 = vadd.f32 %v133, %v136
  %v139 = vlaneseq
  %v140 = vshrl.u32 %v139, 7
  %v141 = vadd.s32 %v140, 12
  %142 = vset.pattern.permute.xlu0 %v141
  %143 = vperm.xlu0 %142, %v72
  %v144 = vpop.permute.xlu0 %143
  %v145 = vlaneseq
  %v146 = vshrl.u32 %v145, 7
  %v147 = vadd.s32 %v146, 12
  %148 = vset.pattern.permute.xlu0 %v147
  %149 = vperm.xlu0 %148, %v79
  %v150 = vpop.permute.xlu0 %149
  %v151 = vperm.slane %v83, 6
  %v152 = vmul.f32 %v151, %v144
  %v153 = vmul.f32 %v151, %v150
  %v154 = vperm.slane %v84, 2
  %v155 = vmul.f32 %v154, %v137
  %v156 = vmul.f32 %v154, %v138
  %v157 = vadd.f32 %v152, %v155
  %v158 = vadd.f32 %v153, %v156
  %v159 = vperm.slane %v84, 4
  %v160 = vmul.f32 %v159, %v99
  %v161 = vmul.f32 %v159, %v100
  %v162 = vperm.slane %v84, 5
  %v163 = vmul.f32 %v162, %v119
  %v164 = vmul.f32 %v162, %v120
  %v165 = vadd.f32 %v160, %v163
  %v166 = vadd.f32 %v161, %v164
  %v167 = vperm.slane %v84, 6
  %v168 = vmul.f32 %v167, %v137
  %v169 = vmul.f32 %v167, %v138
  %v170 = vadd.f32 %v165, %v168
  %v171 = vadd.f32 %v166, %v169
  %v172 = vperm.slane %v84, 7
  %v173 = vmul.f32 %v172, %v157
  %v174 = vmul.f32 %v172, %v158
  %v175 = vadd.f32 %v170, %v173
  %v176 = vadd.f32 %v171, %v174
  %v177 = vmin.f32 %v175, %v157
  %v178 = vmin.f32 %v176, %v158
  %v179 = vperm.slane %v85, 2
  %v180 = vmul.f32 %v179, %v177
  %v181 = vmul.f32 %v179, %v178
  %v182 = vperm.slane %v85, 5
  %v183 = vmul.f32 %v182, %v157
  %v184 = vmul.f32 %v182, %v158
  %v185 = vadd.f32 %v180, %v183
  %v186 = vadd.f32 %v181, %v184
  %v187 = vld [vmem:[%s2] sm:$0xf]
  %189 = vset.pattern.permute.xlu0 4
  %190 = vperm.xlu0 %189, %v187
  %v191 = vpop.permute.xlu0 %190
  %v193 = vmul.f32 %v185, %v191
  %v194 = vmul.f32 %v186, %v191
  %195 = vset.pattern.permute.xlu0 3
  %196 = vperm.xlu0 %195, %v187
  %v197 = vpop.permute.xlu0 %196
  %v199 = vadd.f32 %v193, %v197
  %v200 = vadd.f32 %v194, %v197
  %v201 = vmul.f32 %v199, %v187
  %v202 = vmul.f32 %v200, %v187
  %vm203 = vcmask 19456
  %v204 = vsel %vm203, %v201, 0.0
  %205 = vadd.xlane.f32.xlu0 %v204
  %v206 = vpop.xlane.xlu0 %205
  %v207 = vsel %vm203, %v202, 0.0
  %208 = vadd.xlane.f32.xlu0 %v207
  %v209 = vpop.xlane.xlu0 %208
  %v212 = vlaneseq
  %v213 = vand.u32 %v212, 127
  %v214 = vperm.slane %v206, %v213
  %v215 = vperm.slane %v209, %v213
  %vm216 = vcmask 1041409
  %v217 = vsel %vm216, %v215, %v214
  %vm219 = vcmask 25600
  %220 = vst.msk [vmem:[%s4 + $0x10] sm:$0x3] %vm219, %v217
  // Predicated region
  $region18: #{program_executor_forward.1} parent=0 // pred_check
    _
  $region19: #{program_executor_forward.1} parent=0 // pred_check_branch
    %222 = sbr.rel (0) target = $region21
  $region20: #{program_executor_forward.1} parent=0 // pred_region
    _
  $region21: #{program_executor_forward.1} parent=0 // pred_fallthru
    _
  // Predicated region
  $region22: #{program_executor_forward.1} parent=0 // pred_check
    _
  $region23: #{program_executor_forward.1} parent=0 // pred_check_branch
    %224 = sbr.rel (0) target = $region25
  $region24: #{program_executor_forward.1} parent=0 // pred_region
    _
  $region25: #{program_executor_forward.1} parent=0 // pred_fallthru
    _

</llo_original>
